<compile_context>
chip_gen: v5e
topology: v5e:2x2
jax: 0.10.0
libtpu: 0.0.40
codegen_flags: <defaults>
</compile_context>

<pallas_src>
import functools

import jax
import jax.numpy as jnp
from jax.experimental import pallas as pl
from jax.experimental.pallas import tpu as pltpu

EPS = 1e-8


def _symkl_kernel(lp_ref, lq_ref, o_ref):
    # One row-tile of logits: (TR, V). Inputs may be bf16; compute in f32.
    lp = lp_ref[...].astype(jnp.float32)
    lq = lq_ref[...].astype(jnp.float32)
    V = lp.shape[-1]

    # After `p = softmax + eps; p /= p.sum()` the denominator is 1 + V*eps
    # (a softmax sums to 1 up to rounding) -> compile-time constant, so the
    # renormalization reductions + reciprocals disappear.
    inv_norm = 1.0 / (1.0 + V * EPS)

    def softmax_plus_eps(x):
        m = jnp.max(x, axis=-1, keepdims=True)
        e = jnp.exp(x - m)
        s = jnp.sum(e, axis=-1, keepdims=True)
        return e * pl.reciprocal(s, approx=False) + EPS

    pe = softmax_plus_eps(lp)  # softmax(lp) + eps   (un-normalized)
    qe = softmax_plus_eps(lq)  # softmax(lq) + eps

    # Fused symmetric KL:
    #   0.5*(KL(q||p) + KL(p||q)) = 0.5 * sum_V (p - q) * (log p - log q)
    # with p = pe*inv_norm, q = qe*inv_norm; log(inv_norm) cancels in the log
    # difference and inv_norm factors out of the sum.  log p - log q is
    # computed as a single log of the exact ratio (3 EUP ops/elem, not 4).
    dlog = jnp.log(pe / qe)
    kl = jnp.sum((pe - qe) * dlog, axis=-1)  # (TR,)
    kl = (0.5 * inv_norm) * kl

    # Lane-dense write: output block is (1, 1, TR).
    o_ref[...] = kl.reshape(o_ref.shape).astype(o_ref.dtype)


def _cdiv(a, b):
    return (a + b - 1) // b


def _round_up(x, m):
    return _cdiv(x, m) * m


def _vmem_capacity_bytes():
    # Generation-aware VMEM capacity (per TensorCore). Conservative fallback
    # (64 MiB = v7x) if the query is unavailable.
    try:
        info = pltpu.get_tpu_info()
        cap = getattr(info, "vmem_capacity_bytes", None)
        if cap:
            return int(cap)
    except Exception:
        pass
    return 64 * 1024 * 1024


def _choose_row_tile(V, in_itemsize, vmem_budget_bytes):
    # Per-row footprint (bytes): 2 inputs x 2 pipeline buffers in the wire
    # dtype, plus ~8 live f32 V-wide intermediates inside the kernel body
    # (including the f32 upcasts of bf16 inputs).
    per_row = V * (4 * in_itemsize + 8 * 4)
    rt = vmem_budget_bytes // max(per_row, 1)
    rt = (rt // 8) * 8
    return int(max(8, min(4096, rt)))


@functools.partial(
    jax.jit,
    static_argnames=("row_tile", "vmem_budget_bytes", "vmem_limit_bytes"),
)
def symmetric_kl(logits_p, logits_q, *, row_tile=None, vmem_budget_bytes=None,
                 vmem_limit_bytes=None):
    assert logits_p.shape == logits_q.shape
    assert logits_p.ndim == 3
    B, S, V = logits_p.shape
    R = B * S
    in_itemsize = jnp.dtype(logits_p.dtype).itemsize

    cap = _vmem_capacity_bytes()
    if vmem_budget_bytes is None:
        vmem_budget_bytes = int(cap * 0.55)   # ~70 MiB on 128 MiB parts, ~35 MiB on v7x
    if vmem_limit_bytes is None:
        vmem_limit_bytes = int(cap * 0.75)    # ~96 MiB on 128 MiB parts, ~48 MiB on v7x

    if row_tile is None:
        row_tile = _choose_row_tile(V, in_itemsize, vmem_budget_bytes)
    # Don't tile far past the actual number of rows; keep sublane multiple-of-8.
    row_tile = min(row_tile, _round_up(R, 8))
    # Ensure >= 2 grid steps whenever R > 8 so the "parallel" grid axis can be
    # sharded across v7x's two TensorCores (one extra ~0.35us step elsewhere).
    if R > 8:
        row_tile = min(row_tile, _round_up(_cdiv(R, 2), 8))
    row_tile = max(8, (row_tile // 8) * 8)

    num_tiles = _cdiv(R, row_tile)  # ragged last block handled by Pallas

    lp = logits_p.reshape(R, V)  # free reshapes, no extra HBM traffic
    lq = logits_q.reshape(R, V)

    cost = pl.CostEstimate(
        flops=10 * R * V,
        transcendentals=3 * R * V,  # 2 exp + 1 log(ratio) per element pair
        bytes_accessed=2 * R * V * in_itemsize + R * 4,
    )

    out = pl.pallas_call(
        _symkl_kernel,
        out_shape=jax.ShapeDtypeStruct((num_tiles, 1, row_tile), jnp.float32),
        grid_spec=pltpu.PrefetchScalarGridSpec(
            num_scalar_prefetch=0,
            grid=(num_tiles,),
            in_specs=[
                pl.BlockSpec((row_tile, V), lambda i: (i, 0)),
                pl.BlockSpec((row_tile, V), lambda i: (i, 0)),
            ],
            # Block trailing dims (1, row_tile) equal the full array trailing
            # dims -> legal for any num_tiles, and lane-dense (unmasked vst).
            out_specs=pl.BlockSpec((1, 1, row_tile), lambda i: (i, 0, 0)),
        ),
        compiler_params=pltpu.CompilerParams(
            dimension_semantics=("parallel",),
            vmem_limit_bytes=vmem_limit_bytes,
        ),
        cost_estimate=cost,
    )(lp, lq)

    # Garbage rows from the ragged last tile (if any) are discarded here.
    return out.reshape(num_tiles * row_tile)[:R].reshape(B, S)


def _reference(logits_p, logits_q, eps=EPS):
    p = jax.nn.softmax(logits_p.astype(jnp.float32), axis=-1) + eps
    q = jax.nn.softmax(logits_q.astype(jnp.float32), axis=-1) + eps
    p = p / p.sum(-1, keepdims=True)
    q = q / q.sum(-1, keepdims=True)
    kl_p_q = (q * (jnp.log(q) - jnp.log(p))).sum(-1)
    kl_q_p = (p * (jnp.log(p) - jnp.log(q))).sum(-1)
    return 0.5 * (kl_p_q + kl_q_p)


if __name__ == "__main__":
    key = jax.random.PRNGKey(0)
    k1, k2, k3, k4, k5, k6 = jax.random.split(key, 6)

    # Main check: batch=2, seq=8, vocab=32, f32.
    # R=16 -> row_tile=8 -> 2 full tiles (exercises the multi-tile output path).
    B, S, V = 2, 8, 32
    logits_p = jax.random.normal(k1, (B, S, V), dtype=jnp.float32)
    logits_q = jax.random.normal(k2, (B, S, V), dtype=jnp.float32)
    out = symmetric_kl(logits_p, logits_q)
    jax.block_until_ready(out)
    ref = _reference(logits_p, logits_q)
    assert out.shape == (B, S)
    assert jnp.allclose(out, ref, atol=1e-5, rtol=1e-5), (out, ref)

    # Ragged multi-tile check: R=14, row_tile=8 -> 2 tiles, last one ragged.
    B2, S2, V2 = 2, 7, 40
    lp2 = jax.random.normal(k3, (B2, S2, V2), dtype=jnp.float32)
    lq2 = jax.random.normal(k4, (B2, S2, V2), dtype=jnp.float32)
    out2 = symmetric_kl(lp2, lq2)
    jax.block_until_ready(out2)
    ref2 = _reference(lp2, lq2)
    assert out2.shape == (B2, S2)
    assert jnp.allclose(out2, ref2, atol=1e-5, rtol=1e-5), (out2, ref2)

    # Many-tile ragged check with a forced small row_tile:
    # R=148, row_tile=16 -> 10 tiles, last tile has only 4 valid rows.
    B3, S3, V3 = 4, 37, 64
    lp4 = jax.random.normal(k5, (B3, S3, V3), dtype=jnp.float32)
    lq4 = jax.random.normal(k6, (B3, S3, V3), dtype=jnp.float32)
    out4 = symmetric_kl(lp4, lq4, row_tile=16)
    jax.block_until_ready(out4)
    ref4 = _reference(lp4, lq4)
    assert out4.shape == (B3, S3)
    assert jnp.allclose(out4, ref4, atol=1e-5, rtol=1e-5), (out4, ref4)

    # bf16 input check (inputs stay bf16 on the wire; compute in f32 in-kernel).
    lp3 = logits_p.astype(jnp.bfloat16)
    lq3 = logits_q.astype(jnp.bfloat16)
    out3 = symmetric_kl(lp3, lq3)
    jax.block_until_ready(out3)
    ref3 = _reference(lp3, lq3)
    assert jnp.allclose(out3, ref3, atol=1e-5, rtol=1e-5), (out3, ref3)

    print("KERNEL_OK")
</pallas_src>

<mosaic_0001>
module attributes {stable_mosaic.version = 11 : i64} {
  func.func @_symkl_kernel(%arg0: i32, %arg1: memref<8x32xf32, #tpu.memory_space<vmem>>, %arg2: memref<8x32xf32, #tpu.memory_space<vmem>>, %arg3: memref<1x1x8xf32, #tpu.memory_space<vmem>>) attributes {dimension_semantics = [#tpu.dimension_semantics<parallel>], iteration_bounds = array<i64: 2>, scalar_prefetch = 0 : i64, scratch_operands = 0 : i64, tpu.core_type = #tpu.core_type<tc>, window_params = [{transform_indices = @transform_0, window_bounds = array<i64: 8, 32>}, {transform_indices = @transform_1, window_bounds = array<i64: 8, 32>}, {transform_indices = @transform_2, window_bounds = array<i64: 1, 1, 8>}]} {
    %c0 = arith.constant 0 : index
    %c0_0 = arith.constant 0 : index
    %0 = vector.load %arg1[%c0, %c0_0] : memref<8x32xf32, #tpu.memory_space<vmem>>, vector<8x32xf32>
    %c0_1 = arith.constant 0 : index
    %c0_2 = arith.constant 0 : index
    %1 = vector.load %arg2[%c0_1, %c0_2] : memref<8x32xf32, #tpu.memory_space<vmem>>, vector<8x32xf32>
    %cst = arith.constant dense<0xFF800000> : vector<8xf32>
    %2 = vector.multi_reduction <maximumf>, %0, %cst [1] : vector<8x32xf32> to vector<8xf32>
    %3 = vector.shape_cast %2 : vector<8xf32> to vector<8x1xf32>
    %4 = vector.broadcast %3 : vector<8x1xf32> to vector<8x32xf32>
    %5 = arith.subf %0, %4 : vector<8x32xf32>
    %6 = math.exp %5 : vector<8x32xf32>
    %cst_3 = arith.constant dense<0.000000e+00> : vector<8xf32>
    %7 = vector.multi_reduction <add>, %6, %cst_3 [1] : vector<8x32xf32> to vector<8xf32>
    %8 = vector.shape_cast %7 : vector<8xf32> to vector<8x1xf32>
    %9 = tpu.reciprocal %8 : vector<8x1xf32> -> vector<8x1xf32>
    %10 = vector.broadcast %9 : vector<8x1xf32> to vector<8x32xf32>
    %11 = arith.mulf %6, %10 : vector<8x32xf32>
    %cst_4 = arith.constant 9.99999993E-9 : f32
    %12 = vector.broadcast %cst_4 : f32 to vector<8x32xf32>
    %13 = arith.addf %11, %12 : vector<8x32xf32>
    %cst_5 = arith.constant dense<0xFF800000> : vector<8xf32>
    %14 = vector.multi_reduction <maximumf>, %1, %cst_5 [1] : vector<8x32xf32> to vector<8xf32>
    %15 = vector.shape_cast %14 : vector<8xf32> to vector<8x1xf32>
    %16 = vector.broadcast %15 : vector<8x1xf32> to vector<8x32xf32>
    %17 = arith.subf %1, %16 : vector<8x32xf32>
    %18 = math.exp %17 : vector<8x32xf32>
    %cst_6 = arith.constant dense<0.000000e+00> : vector<8xf32>
    %19 = vector.multi_reduction <add>, %18, %cst_6 [1] : vector<8x32xf32> to vector<8xf32>
    %20 = vector.shape_cast %19 : vector<8xf32> to vector<8x1xf32>
    %21 = tpu.reciprocal %20 : vector<8x1xf32> -> vector<8x1xf32>
    %22 = vector.broadcast %21 : vector<8x1xf32> to vector<8x32xf32>
    %23 = arith.mulf %18, %22 : vector<8x32xf32>
    %cst_7 = arith.constant 9.99999993E-9 : f32
    %24 = vector.broadcast %cst_7 : f32 to vector<8x32xf32>
    %25 = arith.addf %23, %24 : vector<8x32xf32>
    %26 = arith.divf %13, %25 : vector<8x32xf32>
    %27 = math.log %26 : vector<8x32xf32>
    %28 = arith.subf %13, %25 : vector<8x32xf32>
    %29 = arith.mulf %28, %27 : vector<8x32xf32>
    %cst_8 = arith.constant dense<0.000000e+00> : vector<8xf32>
    %30 = vector.multi_reduction <add>, %29, %cst_8 [1] : vector<8x32xf32> to vector<8xf32>
    %cst_9 = arith.constant 0.499999851 : f32
    %31 = vector.broadcast %cst_9 : f32 to vector<8xf32>
    %32 = arith.mulf %31, %30 : vector<8xf32>
    %33 = vector.shape_cast %32 : vector<8xf32> to vector<1x1x8xf32>
    %c0_10 = arith.constant 0 : index
    %c0_11 = arith.constant 0 : index
    %c0_12 = arith.constant 0 : index
    %34 = vector.load %arg3[%c0_10, %c0_11, %c0_12] : memref<1x1x8xf32, #tpu.memory_space<vmem>>, vector<1x1x8xf32>
    tpu.vector_store %arg3[%c0_10, %c0_11, %c0_12], %33 {strides = array<i32>} : memref<1x1x8xf32, #tpu.memory_space<vmem>>, vector<1x1x8xf32>,
    return
  }
  func.func @transform_0(%arg0: i32) -> (i32, i32) {
    %c0_i32 = arith.constant 0 : i32
    %c0_i32_0 = arith.constant 0 : i32
    return %arg0, %c0_i32 : i32, i32
  }
  func.func @transform_1(%arg0: i32) -> (i32, i32) {
    %c0_i32 = arith.constant 0 : i32
    %c0_i32_0 = arith.constant 0 : i32
    return %arg0, %c0_i32 : i32, i32
  }
  func.func @transform_2(%arg0: i32) -> (i32, i32, i32) {
    %c0_i32 = arith.constant 0 : i32
    %c0_i32_0 = arith.constant 0 : i32
    %c0_i32_1 = arith.constant 0 : i32
    return %arg0, %c0_i32, %c0_i32_0 : i32, i32, i32
  }
}

</mosaic_0001>

<llo_original>
// kernel: symmetric_kl.1
$region0: #{symmetric_kl.1}
  #allocation0 [shape = 'u32[]', space=smem, size = 0x4, offset = 0x4, fixed_abs, tag = 'smem constant byte address 0x4 - core index']
  #allocation1 [shape = 'u32[72,128]{1,0:T(1,128)}', space=vmem, size = 0x9000, scoped, tag = 'internal scratch']
  %s0 = inlined_call_operand.hbm [shape: f32[16,32], index: 0, kind: input, shape index: {}]
  %s1 = inlined_call_operand.hbm [shape: f32[16,32], index: 1, kind: input, shape index: {}]
  %s2 = inlined_call_operand.hbm [shape: f32[2,1,8], index: 2, kind: output, shape index: {}]
  %s3 = sld [smem:[#allocation0]]
  $region49: #{symmetric_kl.1} parent=0
    _
  %s5 = ssub.s32 1, %s3
  %s6 = scalar_select 0, %s5, %s3
  $region1: #{symmetric_kl.1} parent=0
    #allocation2 [shape = 'u8[8192]{0}', space=vmem, size = 0x2000, scoped, tag = 'input window, operand 0']
    #allocation3 [shape = 's32[2]{0}', space=sflag, size = 0x8, scoped, tag = 'scoped memory for symmetric_kl.1']
    #allocation4 [shape = 's32[2]{0}', space=sflag, size = 0x8, scoped, tag = 'scoped memory for symmetric_kl.1']
    #allocation5 [shape = 'u8[8192]{0}', space=vmem, size = 0x2000, scoped, tag = 'input window, operand 1']
    #allocation6 [shape = 's32[2]{0}', space=sflag, size = 0x8, scoped, tag = 'scoped memory for symmetric_kl.1']
    #allocation7 [shape = 'u8[1024]{0}', space=vmem, size = 0x400, scoped, tag = 'output window, operand 0']
    %7 = vsyncpa [#allocation3], 0
    %s8 = scalar_lea.sflag [#allocation3], 1
    %9 = vsyncpa %s8, 0
    %10 = vsyncpa [#allocation6], 0
    %s11 = scalar_lea.sflag [#allocation6], 1
    %12 = vsyncpa %s11, 0
    %13 = vsyncpa [#allocation4], 0
    %s14 = scalar_lea.sflag [#allocation4], 1
    %15 = vsyncpa %s14, 0
    loop: start=0, step=1, limit=4
    $region2: #{symmetric_kl.1} parent=1 // loop_pre_header
      _
    $region3: #{symmetric_kl.1} parent=1 // loop_header
      %s17 = sphi 0, %s21
      %p18 = scmp.ge.s32.totalorder %s17, 4
      %s27 = sphi 0, %s29
      %s30 = sphi 0, %s27
      %s31 = sphi 0, %s30
      %s47 = sphi 0, %s31
      %s53 = sphi 0, %s55
      %s56 = sphi 0, %s53
      %s57 = sphi 0, %s56
      %s73 = sphi 0, %s57
      %s79 = sphi 0, %s81
      %s82 = sphi 0, %s79
      %s83 = sphi 0, %s82
      %s99 = sphi 0, %s83
    $region4: #{symmetric_kl.1} parent=1 // loop_header_branch
      %20 = sbr.rel (%p18) target = $region8
    $region5: #{symmetric_kl.1} parent=1 // loop_body
      %s22 = ssub.s32 %s17, 1
      %s23 = ssub.s32 %s17, 2
      %s24 = sadd.s32 %s17, 1
      %s25 = ssub.s32 %s17, %s24
      %p26 = scmp.eq.s32.totalorder %s25, 0
      %s28 = sadd.s32 %s27, 1
      %s29 = scalar_select %p26, %s27, %s28
      %p32 = pneg %p26
      %p33 = scmp.eq.s32.totalorder %s17, 1
      %p34 = por %p32, %p33
      %p35 = scmp.ne.s32.totalorder %s27, %s30
      %p36 = scmp.eq.s32.totalorder %s17, 0
      %p37 = por %p35, %p36
      %p38 = scmp.ne.s32.totalorder %s27, %s30
      %p39 = scmp.eq.s32.totalorder %s22, 1
      %p40 = por %p38, %p39
      %p41 = scmp.ne.s32.totalorder %s30, %s31
      %p42 = scmp.eq.s32.totalorder %s22, 0
      %p43 = por %p41, %p42
      %p44 = scmp.ne.s32.totalorder %s30, %s31
      %p45 = scmp.eq.s32.totalorder %s23, 1
      %p46 = por %p44, %p45
      %p48 = scmp.ne.s32.totalorder %s31, %s47
      %p49 = scmp.eq.s32.totalorder %s23, 0
      %p50 = por %p48, %p49
      %s51 = ssub.s32 %s17, %s24
      %p52 = scmp.eq.s32.totalorder %s51, 0
      %s54 = sadd.s32 %s53, 1
      %s55 = scalar_select %p52, %s53, %s54
      %p58 = pneg %p52
      %p59 = scmp.eq.s32.totalorder %s17, 1
      %p60 = por %p58, %p59
      %p61 = scmp.ne.s32.totalorder %s53, %s56
      %p62 = scmp.eq.s32.totalorder %s17, 0
      %p63 = por %p61, %p62
      %p64 = scmp.ne.s32.totalorder %s53, %s56
      %p65 = scmp.eq.s32.totalorder %s22, 1
      %p66 = por %p64, %p65
      %p67 = scmp.ne.s32.totalorder %s56, %s57
      %p68 = scmp.eq.s32.totalorder %s22, 0
      %p69 = por %p67, %p68
      %p70 = scmp.ne.s32.totalorder %s56, %s57
      %p71 = scmp.eq.s32.totalorder %s23, 1
      %p72 = por %p70, %p71
      %p74 = scmp.ne.s32.totalorder %s57, %s73
      %p75 = scmp.eq.s32.totalorder %s23, 0
      %p76 = por %p74, %p75
      %s77 = ssub.s32 %s17, %s24
      %p78 = scmp.eq.s32.totalorder %s77, 0
      %s80 = sadd.s32 %s79, 1
      %s81 = scalar_select %p78, %s79, %s80
      %p84 = pneg %p78
      %p85 = scmp.eq.s32.totalorder %s17, 1
      %p86 = por %p84, %p85
      %p87 = scmp.ne.s32.totalorder %s79, %s82
      %p88 = scmp.eq.s32.totalorder %s17, 0
      %p89 = por %p87, %p88
      %p90 = scmp.ne.s32.totalorder %s79, %s82
      %p91 = scmp.eq.s32.totalorder %s22, 1
      %p92 = por %p90, %p91
      %p93 = scmp.ne.s32.totalorder %s82, %s83
      %p94 = scmp.eq.s32.totalorder %s22, 0
      %p95 = por %p93, %p94
      %p96 = scmp.ne.s32.totalorder %s82, %s83
      %p97 = scmp.eq.s32.totalorder %s23, 1
      %p98 = por %p96, %p97
      %p100 = scmp.ne.s32.totalorder %s83, %s99
      %p101 = scmp.eq.s32.totalorder %s23, 0
      %p102 = por %p100, %p101
      %p103 = scmp.le.s32.totalorder 1, %s17
      %p104 = scmp.lt.s32.totalorder %s17, 3
      %p105 = pnand %p103, %p104
      %p106 = pneg %p105
      // Predicated region
      $region9: #{symmetric_kl.1} parent=5 // pred_check
        _
      $region10: #{symmetric_kl.1} parent=5 // pred_check_branch
        %108 = sbr.rel (%p105) target = $region12
      $region11: #{symmetric_kl.1} parent=5 // pred_region
        %s109 = ssub.s32 %s17, 1
      $region12: #{symmetric_kl.1} parent=5 // pred_fallthru
        _
      %p110 = scmp.lt.s32.totalorder %s17, 2
      // Predicated region
      $region13: #{symmetric_kl.1} parent=5 // pred_check
        %p111 = pneg %p110
      $region14: #{symmetric_kl.1} parent=5 // pred_check_branch
        %113 = sbr.rel (%p111) target = $region16
      $region15: #{symmetric_kl.1} parent=5 // pred_region
        // Predicated region
        $region17: #{symmetric_kl.1} parent=15 // pred_check
          %p114 = pneg %p37
        $region18: #{symmetric_kl.1} parent=15 // pred_check_branch
          %116 = sbr.rel (%p114) target = $region20
        $region19: #{symmetric_kl.1} parent=15 // pred_region
          %s117 = sand.u32 %s27, 1
          %s118 = scalar_lea.sflag [#allocation3], %s117
          %s119 = sand.u32 %s27, 1
          %s120 = smul.addr %s119, 8
          %s121 = scalar_lea.vmem [#allocation2], %s120
          %123 = vsyncadd %s118, 0
          %s124 = smul.addr %s17, 8
          %s125 = scalar_lea.hbm %s0, %s124
          %s127 = sshll.u32 %s125, 4
          %s128 = int_to_ptr.hbm [resolvable:$true] %s127
          %s129 = sshll.u32 %s121, 4
          %s130 = int_to_ptr.vmem [resolvable:$true] %s129
          %132 = dma.hbm_to_vmem [thread:$0]  %s128, 128, %s130, %s118
        $region20: #{symmetric_kl.1} parent=15 // pred_fallthru
          _
        // Predicated region
        $region21: #{symmetric_kl.1} parent=15 // pred_check
          %p133 = pneg %p63
        $region22: #{symmetric_kl.1} parent=15 // pred_check_branch
          %135 = sbr.rel (%p133) target = $region24
        $region23: #{symmetric_kl.1} parent=15 // pred_region
          %s136 = sand.u32 %s53, 1
          %s137 = scalar_lea.sflag [#allocation6], %s136
          %s138 = sand.u32 %s53, 1
          %s139 = smul.addr %s138, 8
          %s140 = scalar_lea.vmem [#allocation5], %s139
          %142 = vsyncadd %s137, 0
          %s143 = smul.addr %s17, 8
          %s144 = scalar_lea.hbm %s1, %s143
          %s146 = sshll.u32 %s144, 4
          %s147 = int_to_ptr.hbm [resolvable:$true] %s146
          %s148 = sshll.u32 %s140, 4
          %s149 = int_to_ptr.vmem [resolvable:$true] %s148
          %151 = dma.hbm_to_vmem [thread:$0]  %s147, 128, %s149, %s137
        $region24: #{symmetric_kl.1} parent=15 // pred_fallthru
          _
      $region16: #{symmetric_kl.1} parent=5 // pred_fallthru
        _
      %p152 = scmp.le.s32.totalorder 1, %s17
      %p153 = scmp.lt.s32.totalorder %s17, 3
      %p154 = pnand %p152, %p153
      %p155 = pneg %p154
      // Predicated region
      $region25: #{symmetric_kl.1} parent=5 // pred_check
        _
      $region26: #{symmetric_kl.1} parent=5 // pred_check_branch
        %157 = sbr.rel (%p154) target = $region28
      $region27: #{symmetric_kl.1} parent=5 // pred_region
        %s158 = ssub.s32 %s17, 1
        %s159 = sand.u32 %s30, 1
        %s160 = scalar_lea.sflag [#allocation3], %s159
        %s161 = sand.u32 %s30, 1
        %s162 = smul.addr %s161, 8
        %s163 = scalar_lea.vmem [#allocation2], %s162
        // Predicated region
        $region29: #{symmetric_kl.1} parent=27 // pred_check
          %p164 = pneg %p43
        $region30: #{symmetric_kl.1} parent=27 // pred_check_branch
          %166 = sbr.rel (%p164) target = $region32
        $region31: #{symmetric_kl.1} parent=27 // pred_region
          %168 = dma.done %s160, 128
        $region32: #{symmetric_kl.1} parent=27 // pred_fallthru
          _
        %s169 = sand.u32 %s56, 1
        %s170 = scalar_lea.sflag [#allocation6], %s169
        %s171 = sand.u32 %s56, 1
        %s172 = smul.addr %s171, 8
        %s173 = scalar_lea.vmem [#allocation5], %s172
        // Predicated region
        $region33: #{symmetric_kl.1} parent=27 // pred_check
          %p174 = pneg %p69
        $region34: #{symmetric_kl.1} parent=27 // pred_check_branch
          %176 = sbr.rel (%p174) target = $region36
        $region35: #{symmetric_kl.1} parent=27 // pred_region
          %178 = dma.done %s170, 128
        $region36: #{symmetric_kl.1} parent=27 // pred_fallthru
          _
        %s179 = sand.u32 %s30, 1
        %s180 = scalar_lea.sflag [#allocation3], %s179
        %s181 = sand.u32 %s30, 1
        %s182 = smul.addr %s181, 8
        %s183 = scalar_lea.vmem [#allocation2], %s182
        %p184 = pneg %p43
        %p185 = pneg %p40
        %s186 = sand.u32 %s56, 1
        %s187 = scalar_lea.sflag [#allocation6], %s186
        %s188 = sand.u32 %s56, 1
        %s189 = smul.addr %s188, 8
        %s190 = scalar_lea.vmem [#allocation5], %s189
        %p191 = pneg %p69
        %p192 = pneg %p66
        %p193 = pneg %p95
        %p194 = pneg %p92
        %s195 = sand.u32 %s82, 1
        %s196 = scalar_lea.sflag [#allocation4], %s195
        %s197 = sand.u32 %s82, 1
        %s198 = scalar_lea.vmem [#allocation7], %s197
        %v199 = vld [vmem:[%s163] sm:$0xff]
        %v200 = vld [vmem:[%s173] sm:$0xff]
        %vm201 = vcmask 261120
        %v202 = vsel %vm201, %v199, -inf
        %203 = vmax.xlane.f32.xlu0 %v202
        %v204 = vpop.xlane.xlu0 %203
        %v205 = vsub.f32 %v199, %v204
        %v206 = vmul.f32 %v205, 1.442695
        %v207 = vpow.pop %v206
        %v208 = vsel %vm201, %v207, 0.0
        %209 = vadd.xlane.f32.xlu0 %v208
        %v210 = vpop.xlane.xlu0 %209
        %v211 = vrcp.pop %v210
        %v212 = vmul.f32 %v210, %v211
        %v213 = vsub.f32 1.0, %v212
        %v214 = vmul.f32 %v211, %v213
        %v215 = vadd.f32 %v211, %v214
        %vm216 = vweird.f32 %v210
        %vm217 = vweird.f32 %v211
        %vm218 = vmor %vm216, %vm217
        %v219 = vsel %vm218, %v211, %v215
        %v220 = vand.u32 2147483647, %v210
        %vm221 = vcmp.eq.f32.partialorder %v220, 8.507059e+37
        %v222 = vand.u32 %v210, 2147483648
        %v223 = vor.u32 1.1754944e-38, %v222
        %v224 = vsel %vm221, %v223, %v219
        %v225 = vmul.f32 %v207, %v224
        %v226 = vadd.f32 %v225, 1e-08
        %v227 = vsel %vm201, %v200, -inf
        %228 = vmax.xlane.f32.xlu0 %v227
        %v229 = vpop.xlane.xlu0 %228
        %v230 = vsub.f32 %v200, %v229
        %v231 = vmul.f32 %v230, 1.442695
        %v232 = vpow.pop %v231
        %v233 = vsel %vm201, %v232, 0.0
        %234 = vadd.xlane.f32.xlu0 %v233
        %v235 = vpop.xlane.xlu0 %234
        %v236 = vrcp.pop %v235
        %v237 = vmul.f32 %v235, %v236
        %v238 = vsub.f32 1.0, %v237
        %v239 = vmul.f32 %v236, %v238
        %v240 = vadd.f32 %v236, %v239
        %vm241 = vweird.f32 %v235
        %vm242 = vweird.f32 %v236
        %vm243 = vmor %vm241, %vm242
        %v244 = vsel %vm243, %v236, %v240
        %v245 = vand.u32 2147483647, %v235
        %vm246 = vcmp.eq.f32.partialorder %v245, 8.507059e+37
        %v247 = vand.u32 %v235, 2147483648
        %v248 = vor.u32 1.1754944e-38, %v247
        %v249 = vsel %vm246, %v248, %v244
        %v250 = vmul.f32 %v232, %v249
        %v251 = vadd.f32 %v250, 1e-08
        %v252 = vrcp.pop %v251
        %v253 = vmul.f32 %v251, %v252
        %v254 = vsub.f32 1.0, %v253
        %v255 = vmul.f32 %v252, %v254
        %v256 = vadd.f32 %v252, %v255
        %vm257 = vweird.f32 %v251
        %vm258 = vweird.f32 %v252
        %vm259 = vmor %vm257, %vm258
        %v260 = vsel %vm259, %v252, %v256
        %v261 = vand.u32 2147483647, %v251
        %vm262 = vcmp.eq.f32.partialorder %v261, 8.507059e+37
        %v263 = vand.u32 %v251, 2147483648
        %v264 = vor.u32 1.1754944e-38, %v263
        %v265 = vsel %vm262, %v264, %v260
        %v266 = vmul.f32 %v226, %v265
        %v267 = vlog2.pop %v266
        %v268 = vmul.f32 %v267, 0.6931472
        %v269 = vsub.f32 %v226, %v251
        %v270 = vmul.f32 %v269, %v268
        %v271 = vsel %vm201, %v270, 0.0
        %272 = vadd.xlane.f32.xlu0 %v271
        %v273 = vpop.xlane.xlu0 %272
        %v274 = vmul.f32 %v273, 0.49999985
        %v276 = vlaneseq
        %v277 = vand.u32 %v276, 127
        %v278 = vperm.slane %v274, %v277
        %vm280 = vcmask 57344
        %281 = vst.msk [vmem:[%s198] sm:$0x1] %vm280, %v278
        %s282 = sand.u32 %s82, 1
        %s283 = scalar_lea.sflag [#allocation4], %s282
        %s284 = sand.u32 %s82, 1
        %s285 = scalar_lea.vmem [#allocation7], %s284
        // Predicated region
        $region37: #{symmetric_kl.1} parent=27 // pred_check
          %p286 = pneg %p92
        $region38: #{symmetric_kl.1} parent=27 // pred_check_branch
          %288 = sbr.rel (%p286) target = $region40
        $region39: #{symmetric_kl.1} parent=27 // pred_region
          %290 = vsyncadd %s283, 0
          %s291 = scalar_lea.hbm %s2, %s22
          %s293 = sshll.u32 %s285, 4
          %s294 = int_to_ptr.vmem [resolvable:$true] %s293
          %s295 = sshll.u32 %s291, 4
          %s296 = int_to_ptr.hbm [resolvable:$true] %s295
          %298 = dma.vmem_to_hbm [thread:$0]  %s294, 16, %s296, %s283
        $region40: #{symmetric_kl.1} parent=27 // pred_fallthru
          _
      $region28: #{symmetric_kl.1} parent=5 // pred_fallthru
        _
      %p299 = scmp.le.s32.totalorder 2, %s17
      // Predicated region
      $region41: #{symmetric_kl.1} parent=5 // pred_check
        %p300 = pneg %p299
      $region42: #{symmetric_kl.1} parent=5 // pred_check_branch
        %302 = sbr.rel (%p300) target = $region44
      $region43: #{symmetric_kl.1} parent=5 // pred_region
        %s303 = ssub.s32 %s17, 2
        // Predicated region
        $region45: #{symmetric_kl.1} parent=43 // pred_check
          %p304 = pneg %p98
        $region46: #{symmetric_kl.1} parent=43 // pred_check_branch
          %306 = sbr.rel (%p304) target = $region48
        $region47: #{symmetric_kl.1} parent=43 // pred_region
          %s307 = sand.u32 %s83, 1
          %s308 = scalar_lea.sflag [#allocation4], %s307
          %s309 = sand.u32 %s83, 1
          %s310 = scalar_lea.vmem [#allocation7], %s309
          %312 = dma.done %s308, 16
        $region48: #{symmetric_kl.1} parent=43 // pred_fallthru
          _
      $region44: #{symmetric_kl.1} parent=5 // pred_fallthru
        _
    $region6: #{symmetric_kl.1} parent=1 // loop_footer
      %s21 = sadd.s32 1, %s17
    $region7: #{symmetric_kl.1} parent=1 // loop_footer_branch
      %16 = sbr.rel target = $region3
    $region8: #{symmetric_kl.1} parent=1 // loop_exit
      _
    %313 = vsyncpa [#allocation3], 1
    %s314 = scalar_lea.sflag [#allocation3], 1
    %315 = vsyncpa %s314, 1
    %316 = vsyncpa [#allocation6], 1
    %s317 = scalar_lea.sflag [#allocation6], 1
    %318 = vsyncpa %s317, 1
    %319 = vsyncpa [#allocation4], 1
    %s320 = scalar_lea.sflag [#allocation4], 1
    %321 = vsyncpa %s320, 1

</llo_original>
